<compile_context>
chip_gen: v7x
topology: tpu7x:2x2x1
jax: 0.10.0
libtpu: 0.0.40
codegen_flags: <defaults>
</compile_context>

<pallas_src>
import functools
import math

import jax
import jax.numpy as jnp
import numpy as np
from jax.experimental import pallas as pl
from jax.experimental.pallas import tpu as pltpu


def _label_smoothing_kernel(x_ref, tgt_ref, out_ref, *,
                            confidence, log_confidence,
                            fill, log_fill, padding_idx):
    """One grid step = one tile of rows -> one (8,128) partial-sum output block."""
    x = x_ref[...].astype(jnp.float32)       # (tile_n, V) log-probabilities
    tgt = tgt_ref[...]                       # (tile_n, 1) int32 targets
    tn, V = x.shape

    col = jax.lax.broadcasted_iota(jnp.int32, (tn, V), 1)
    is_tgt = col == tgt                                               # confidence slot
    valid = (col != padding_idx) & (tgt != padding_idx) & (tgt != 1)  # col + row masks

    # true_dist has only two nonzero values, so log(true_dist) is a compile-time
    # constant -> zero EUP transcendentals over the tile.
    zeros = jnp.zeros_like(x)
    on = confidence * (log_confidence - x) if confidence > 0.0 else zeros
    off = fill * (log_fill - x) if fill > 0.0 else zeros

    contrib = jnp.where(valid, jnp.where(is_tgt, on, off), 0.0)
    s = jnp.sum(contrib)

    # Lane/sublane-aligned (8, 128) output block; partial sum lives at [0, 0].
    r = jax.lax.broadcasted_iota(jnp.int32, (8, 128), 0)
    c = jax.lax.broadcasted_iota(jnp.int32, (8, 128), 1)
    out_ref[0] = jnp.where((r == 0) & (c == 0), s, 0.0)


def _round_up(a, b):
    return ((a + b - 1) // b) * b


def _vmem_limit_bytes():
    try:
        cap = int(getattr(pltpu.get_tpu_info(), "vmem_capacity_bytes", 64 << 20))
    except Exception:
        cap = 64 << 20
    cap = max(cap, 32 << 20)
    # Stay well under physical VMEM (v7x: 64 MiB/TC) but above the default scoped limit.
    return int(min(int(0.75 * cap), 100 << 20))


def label_smoothing_loss(x, target, *, size, padding_idx=0, smoothing=0.0,
                         tile_n=None):
    """x: (N, size) float log-probs; target: (N,) int. Returns scalar f32 summed KL."""
    N, V = x.shape
    assert V == size
    if size <= 2:
        raise ValueError("size must be > 2 (smoothing mass is split over size-2 classes)")

    smoothing = float(smoothing)
    confidence = 1.0 - smoothing
    fill = smoothing / (size - 2)
    log_confidence = math.log(confidence) if confidence > 0.0 else 0.0
    log_fill = math.log(fill) if fill > 0.0 else 0.0

    vmem_limit = _vmem_limit_bytes()
    if tile_n is None:
        # Single-buffer x-tile budget ~ vmem_limit/10: leaves room for the double
        # buffer plus the handful of elementwise temporaries over the tile.
        x_tile_budget = max(512 << 10, vmem_limit // 10)
        tile_n = x_tile_budget // (V * 4)
    tile_n = int(tile_n)
    tile_n = max(8, (tile_n // 8) * 8)
    tile_n = min(tile_n, 4096, _round_up(N, 8))
    # TODO(synk): for extremely large vocabularies (tile_n=8 still blowing the VMEM
    # budget) add a second "arbitrary" grid axis over V with an iota column offset.

    num_blocks = -(-N // tile_n)
    n_pad = num_blocks * tile_n
    if n_pad != N:
        # Padded rows get target == padding_idx -> whole row masked to zero.
        x = jnp.pad(x, ((0, n_pad - N), (0, 0)))
        target = jnp.pad(target, (0, n_pad - N), constant_values=padding_idx)
    target2d = target.reshape(n_pad, 1).astype(jnp.int32)

    kernel = functools.partial(
        _label_smoothing_kernel,
        confidence=confidence, log_confidence=log_confidence,
        fill=fill, log_fill=log_fill, padding_idx=int(padding_idx))

    partials = pl.pallas_call(
        kernel,
        out_shape=jax.ShapeDtypeStruct((num_blocks, 8, 128), jnp.float32),
        grid_spec=pltpu.PrefetchScalarGridSpec(
            num_scalar_prefetch=0,
            grid=(num_blocks,),
            in_specs=[
                pl.BlockSpec((tile_n, V), lambda i: (i, 0)),
                pl.BlockSpec((tile_n, 1), lambda i: (i, 0)),
            ],
            out_specs=pl.BlockSpec((1, 8, 128), lambda i: (i, 0, 0)),
        ),
        compiler_params=pltpu.CompilerParams(
            dimension_semantics=("parallel",),   # independent per-block outputs
            vmem_limit_bytes=vmem_limit,
        ),
    )(x, target2d)
    return jnp.sum(partials)


def _reference(x, target, *, size, padding_idx, smoothing):
    """Pure-JAX reference mirroring the PyTorch forward."""
    confidence = 1.0 - smoothing
    N, V = x.shape
    col = jnp.arange(V)[None, :]
    td = jnp.full((N, V), smoothing / (size - 2), jnp.float32)
    td = jnp.where(col == target[:, None], confidence, td)
    td = td.at[:, padding_idx].set(0.0)
    row_mask = (target == padding_idx) | (target == 1)
    td = jnp.where(row_mask[:, None], 0.0, td)
    contrib = jnp.where(td > 0, td * (jnp.log(jnp.where(td > 0, td, 1.0)) - x), 0.0)
    return jnp.sum(contrib)


if __name__ == "__main__":
    key = jax.random.PRNGKey(0)
    padding_idx = 0
    smoothing = 0.1

    # Case 1: small, single block (auto tile_n).
    N, V = 8, 32
    kx, kt, kx2, kt2 = jax.random.split(key, 4)
    x = jax.nn.log_softmax(jax.random.normal(kx, (N, V), dtype=jnp.float32), axis=-1)
    target = jax.random.randint(kt, (N,), 0, V, dtype=jnp.int32)
    target = target.at[0].set(padding_idx).at[1].set(1)   # hit both special-cased targets

    loss = label_smoothing_loss(x, target, size=V,
                                padding_idx=padding_idx, smoothing=smoothing)
    loss = jax.block_until_ready(loss)
    ref = _reference(x, target, size=V, padding_idx=padding_idx, smoothing=smoothing)
    np.testing.assert_allclose(np.asarray(loss), np.asarray(ref), rtol=1e-5, atol=1e-4)

    # Case 2: ragged N with multiple parallel row blocks (exercises padding + grid).
    N2, V2 = 50, 128
    x2 = jax.nn.log_softmax(jax.random.normal(kx2, (N2, V2), dtype=jnp.float32), axis=-1)
    target2 = jax.random.randint(kt2, (N2,), 0, V2, dtype=jnp.int32)
    target2 = target2.at[0].set(padding_idx).at[1].set(1)

    loss2 = label_smoothing_loss(x2, target2, size=V2, padding_idx=padding_idx,
                                 smoothing=smoothing, tile_n=16)
    loss2 = jax.block_until_ready(loss2)
    ref2 = _reference(x2, target2, size=V2, padding_idx=padding_idx, smoothing=smoothing)
    np.testing.assert_allclose(np.asarray(loss2), np.asarray(ref2), rtol=1e-5, atol=1e-4)

    print("KERNEL_OK")
</pallas_src>

<mosaic_0001>
module attributes {stable_mosaic.version = 11 : i64} {
  func.func @_label_smoothing_kernel(%arg0: i32, %arg1: memref<8x32xf32, #tpu.memory_space<vmem>>, %arg2: memref<8x1xi32, #tpu.memory_space<vmem>>, %arg3: memref<1x8x128xf32, #tpu.memory_space<vmem>>) attributes {dimension_semantics = [#tpu.dimension_semantics<parallel>], iteration_bounds = array<i64: 1>, scalar_prefetch = 0 : i64, scratch_operands = 0 : i64, tpu.core_type = #tpu.core_type<tc>, window_params = [{transform_indices = @transform_0, window_bounds = array<i64: 8, 32>}, {transform_indices = @transform_1, window_bounds = array<i64: 8, 1>}, {transform_indices = @transform_2, window_bounds = array<i64: 1, 8, 128>}]} {
    %c0 = arith.constant 0 : index
    %c0_0 = arith.constant 0 : index
    %0 = vector.load %arg1[%c0, %c0_0] : memref<8x32xf32, #tpu.memory_space<vmem>>, vector<8x32xf32>
    %c0_1 = arith.constant 0 : index
    %c0_2 = arith.constant 0 : index
    %1 = vector.load %arg2[%c0_1, %c0_2] : memref<8x1xi32, #tpu.memory_space<vmem>>, vector<8x1xi32>
    %2 = tpu.iota {dimensions = array<i32: 1>} : vector<8x32xi32>
    %3 = vector.broadcast %1 : vector<8x1xi32> to vector<8x32xi32>
    %4 = arith.cmpi eq, %2, %3 : vector<8x32xi32>
    %c0_i32 = arith.constant 0 : i32
    %5 = vector.broadcast %c0_i32 : i32 to vector<8x32xi32>
    %6 = arith.cmpi ne, %2, %5 : vector<8x32xi32>
    %c0_i32_3 = arith.constant 0 : i32
    %7 = vector.broadcast %c0_i32_3 : i32 to vector<8x1xi32>
    %8 = arith.cmpi ne, %1, %7 : vector<8x1xi32>
    %9 = vector.broadcast %8 : vector<8x1xi1> to vector<8x32xi1>
    %10 = arith.andi %6, %9 : vector<8x32xi1>
    %c1_i32 = arith.constant 1 : i32
    %11 = vector.broadcast %c1_i32 : i32 to vector<8x1xi32>
    %12 = arith.cmpi ne, %1, %11 : vector<8x1xi32>
    %13 = vector.broadcast %12 : vector<8x1xi1> to vector<8x32xi1>
    %14 = arith.andi %10, %13 : vector<8x32xi1>
    %cst = arith.constant -0.105360515 : f32
    %15 = vector.broadcast %cst : f32 to vector<8x32xf32>
    %16 = arith.subf %15, %0 : vector<8x32xf32>
    %cst_4 = arith.constant 0.899999976 : f32
    %17 = vector.broadcast %cst_4 : f32 to vector<8x32xf32>
    %18 = arith.mulf %17, %16 : vector<8x32xf32>
    %cst_5 = arith.constant -5.70378256 : f32
    %19 = vector.broadcast %cst_5 : f32 to vector<8x32xf32>
    %20 = arith.subf %19, %0 : vector<8x32xf32>
    %cst_6 = arith.constant 0.00333333341 : f32
    %21 = vector.broadcast %cst_6 : f32 to vector<8x32xf32>
    %22 = arith.mulf %21, %20 : vector<8x32xf32>
    %23 = arith.select %4, %18, %22 : vector<8x32xi1>, vector<8x32xf32>
    %cst_7 = arith.constant 0.000000e+00 : f32
    %24 = vector.broadcast %cst_7 : f32 to vector<8x32xf32>
    %25 = arith.select %14, %23, %24 : vector<8x32xi1>, vector<8x32xf32>
    %26 = vector.shape_cast %25 : vector<8x32xf32> to vector<1x8x32xf32>
    %cst_8 = arith.constant dense<0.000000e+00> : vector<1xf32>
    %27 = vector.multi_reduction <add>, %26, %cst_8 [1, 2] : vector<1x8x32xf32> to vector<1xf32>
    %28 = vector.shape_cast %27 : vector<1xf32> to vector<1x1x1xf32>
    %29 = vector.extract %28[0, 0, 0] : f32 from vector<1x1x1xf32>
    %30 = tpu.iota {dimensions = array<i32: 0>} : vector<8x128xi32>
    %31 = tpu.iota {dimensions = array<i32: 1>} : vector<8x128xi32>
    %c0_i32_9 = arith.constant 0 : i32
    %32 = vector.broadcast %c0_i32_9 : i32 to vector<8x128xi32>
    %33 = arith.cmpi eq, %30, %32 : vector<8x128xi32>
    %c0_i32_10 = arith.constant 0 : i32
    %34 = vector.broadcast %c0_i32_10 : i32 to vector<8x128xi32>
    %35 = arith.cmpi eq, %31, %34 : vector<8x128xi32>
    %36 = arith.andi %33, %35 : vector<8x128xi1>
    %cst_11 = arith.constant 0.000000e+00 : f32
    %37 = vector.broadcast %29 : f32 to vector<8x128xf32>
    %38 = vector.broadcast %cst_11 : f32 to vector<8x128xf32>
    %39 = arith.select %36, %37, %38 : vector<8x128xi1>, vector<8x128xf32>
    %c0_12 = arith.constant 0 : index
    %c0_13 = arith.constant 0 : index
    %c0_14 = arith.constant 0 : index
    %40 = vector.load %arg3[%c0_12, %c0_13, %c0_14] : memref<1x8x128xf32, #tpu.memory_space<vmem>>, vector<1x8x128xf32>
    %41 = vector.shape_cast %40 : vector<1x8x128xf32> to vector<8x128xf32>
    %42 = vector.shape_cast %39 : vector<8x128xf32> to vector<1x8x128xf32>
    tpu.vector_store %arg3[%c0_12, %c0_13, %c0_14], %42 {strides = array<i32>} : memref<1x8x128xf32, #tpu.memory_space<vmem>>, vector<1x8x128xf32>,
    return
  }
  func.func @transform_0(%arg0: i32) -> (i32, i32) {
    %c0_i32 = arith.constant 0 : i32
    %c0_i32_0 = arith.constant 0 : i32
    return %arg0, %c0_i32 : i32, i32
  }
  func.func @transform_1(%arg0: i32) -> (i32, i32) {
    %c0_i32 = arith.constant 0 : i32
    %c0_i32_0 = arith.constant 0 : i32
    return %arg0, %c0_i32 : i32, i32
  }
  func.func @transform_2(%arg0: i32) -> (i32, i32, i32) {
    %c0_i32 = arith.constant 0 : i32
    %c0_i32_0 = arith.constant 0 : i32
    %c0_i32_1 = arith.constant 0 : i32
    return %arg0, %c0_i32, %c0_i32_0 : i32, i32, i32
  }
}

</mosaic_0001>

<llo_original>
// kernel: tpu_custom_call.1
$region0: #{tpu_custom_call.1}
  #allocation0 [shape = 'u32[]', space=smem, size = 0x4, offset = 0x4, fixed_abs, tag = 'smem constant byte address 0x4 - core index']
  #allocation1 [shape = 'u32[144,128]{1,0:T(1,128)}', space=vmem, size = 0x12000, scoped, tag = 'internal scratch']
  %s0 = inlined_call_operand.vmem [shape: f32[8,32], index: 0, kind: input, shape index: {}]
  %s1 = inlined_call_operand.vmem [shape: s32[8,1], index: 1, kind: input, shape index: {}]
  %s2 = inlined_call_operand.hbm [shape: f32[1,8,128], index: 2, kind: output, shape index: {}]
  %s3 = sld [smem:[#allocation0]]
  $region18: #{tpu_custom_call.1} parent=0
    _
  %s5 = ssub.s32 1, %s3
  %s6 = scalar_select 0, %s5, %s3
  $region1: #{tpu_custom_call.1} parent=0
    #allocation2 [shape = 'u8[4096]{0}', space=vmem, size = 0x1000, scoped, tag = 'output window, operand 0, single buffered']
    #allocation3 [shape = 's32[1]{0}', space=sflag, size = 0x4, scoped, tag = 'scoped memory for tpu_custom_call.1']
    %7 = vsyncpa [#allocation3], 0
    // Predicated region
    $region2: #{tpu_custom_call.1} parent=1 // pred_check
      _
    $region3: #{tpu_custom_call.1} parent=1 // pred_check_branch
      %9 = sbr.rel (0) target = $region5
    $region4: #{tpu_custom_call.1} parent=1 // pred_region
      _
    $region5: #{tpu_custom_call.1} parent=1 // pred_fallthru
      _
    // Predicated region
    $region6: #{tpu_custom_call.1} parent=1 // pred_check
      _
    $region7: #{tpu_custom_call.1} parent=1 // pred_check_branch
      %11 = sbr.rel (0) target = $region9
    $region8: #{tpu_custom_call.1} parent=1 // pred_region
      _
    $region9: #{tpu_custom_call.1} parent=1 // pred_fallthru
      _
    %v12 = vld [vmem:[%s0] sm:$0xff]
    %v13 = vld [vmem:[%s1] sm:$0xff]
    %v14 = vlaneseq
    %v15 = vand.u32 %v14, 127
    %16 = vset.pattern.permute.xlu0 0
    %17 = vperm.xlu0 %16, %v13
    %v18 = vpop.permute.xlu0 %17
    %vm19 = vcmp.eq.s32.totalorder %v15, %v18
    %vm20 = vcmp.ne.s32.totalorder %v15, 0
    %vm21 = vcmp.ne.s32.totalorder %v13, 0
    %v22 = vsel %vm21, 1, 0
    %23 = vset.pattern.permute.xlu0 0
    %24 = vperm.xlu0 %23, %v22
    %v25 = vpop.permute.xlu0 %24
    %vm26 = vcmp.eq.s32.totalorder %v25, 1
    %vm27 = vmand %vm20, %vm26
    %vm28 = vcmp.ne.s32.totalorder %v13, 1
    %v29 = vsel %vm28, 1, 0
    %30 = vset.pattern.permute.xlu0 0
    %31 = vperm.xlu0 %30, %v29
    %v32 = vpop.permute.xlu0 %31
    %vm33 = vcmp.eq.s32.totalorder %v32, 1
    %vm34 = vmand %vm27, %vm33
    %v35 = vsub.f32 -0.105360515, %v12
    %v36 = vmul.f32 %v35, 0.9
    %v37 = vsub.f32 -5.7037826, %v12
    %v38 = vmul.f32 %v37, 0.0033333334
    %v39 = vsel %vm19, %v36, %v38
    %v40 = vsel %vm34, %v39, 0.0
    %vm41 = vcmask 261120
    %v42 = vsel %vm41, %v40, 0.0
    %43 = vadd.xlane.f32.xlu0 %v42
    %v44 = vpop.xlane.xlu0 %43
    %v45 = vrot.slane %v44, 4
    %v46 = vadd.f32 %v44, %v45
    %v47 = vrot.slane %v46, 2
    %v48 = vadd.f32 %v46, %v47
    %v49 = vrot.slane %v48, 1
    %v50 = vadd.f32 %v48, %v49
    %s51 = vtos %v50
    %v52 = vlaneseq
    %v53 = vshrl.u32 %v52, 7
    %vm54 = vcmp.eq.s32.totalorder %v53, 0
    %vm55 = vcmp.eq.s32.totalorder %v15, 0
    %vm56 = vmand %vm54, %vm55
    %v57 = vstv %s51
    %v58 = vsel %vm56, %v57, 0.0
    %59 = vst [vmem:[#allocation2] sm:$0xff] %v58
    // Predicated region
    $region10: #{tpu_custom_call.1} parent=1 // pred_check
      _
    $region11: #{tpu_custom_call.1} parent=1 // pred_check_branch
      %61 = sbr.rel (0) target = $region13
    $region12: #{tpu_custom_call.1} parent=1 // pred_region
      %s63 = ssub.s32 128, 128
      %64 = vsyncadd [#allocation3], %s63
      %s66 = sshll.u32 [#allocation2], 4
      %s67 = int_to_ptr.vmem [resolvable:$true] %s66
      %69 = dma.vmem_to_hbm [thread:$0]  %s67, 128, %s2, [#allocation3]
    $region13: #{tpu_custom_call.1} parent=1 // pred_fallthru
      _
    // Predicated region
    $region14: #{tpu_custom_call.1} parent=1 // pred_check
      _
    $region15: #{tpu_custom_call.1} parent=1 // pred_check_branch
      %71 = sbr.rel (0) target = $region17
    $region16: #{tpu_custom_call.1} parent=1 // pred_region
      %72 = dma.done [#allocation3], 128
    $region17: #{tpu_custom_call.1} parent=1 // pred_fallthru
      _
    %73 = vsyncpa [#allocation3], 1

</llo_original>
